<compile_context>
chip_gen: v7x
topology: tpu7x:2x2x1
jax: 0.10.0
libtpu: 0.0.40
codegen_flags: <defaults>
</compile_context>

<pallas_src>
import math

import jax
import jax.numpy as jnp
from jax.experimental import pallas as pl
from jax.experimental.pallas import tpu as pltpu


def _round_up(x, m):
    return ((x + m - 1) // m) * m


# ---------------------------------------------------------------------------
# Kernels
# ---------------------------------------------------------------------------
def _linear_kernel(x_ref, w_ref, b_ref, o_ref):
    """Single-K-block body: out = x @ w + b (f32 accumulate, cast on store)."""
    acc = jnp.dot(x_ref[...], w_ref[...], preferred_element_type=jnp.float32)
    o_ref[...] = (acc + b_ref[...]).astype(o_ref.dtype)


def _linear_kernel_kacc(x_ref, w_ref, b_ref, o_ref, acc_ref):
    """K-tiled body: accumulate partial products in an f32 VMEM scratch."""
    k = pl.program_id(2)

    @pl.when(k == 0)
    def _init():
        acc_ref[...] = jnp.zeros_like(acc_ref)

    acc_ref[...] += jnp.dot(x_ref[...], w_ref[...],
                            preferred_element_type=jnp.float32)

    @pl.when(k == pl.num_programs(2) - 1)
    def _finalize():
        o_ref[...] = (acc_ref[...] + b_ref[...]).astype(o_ref.dtype)


# ---------------------------------------------------------------------------
# Tiling heuristics
# ---------------------------------------------------------------------------
def _vmem_budget():
    """Generation-aware (tile budget, scoped-VMEM limit) in bytes."""
    cap = 64 * 1024 * 1024
    try:
        cap = int(getattr(pltpu.get_tpu_info(), "vmem_capacity_bytes", cap))
    except Exception:
        pass
    if cap >= 100 * 1024 * 1024:                     # v5e / v6e: 128 MiB VMEM
        return 80 * 1024 * 1024, 100 * 1024 * 1024
    return 24 * 1024 * 1024, 48 * 1024 * 1024        # v7x: 64 MiB physical


def _pick_tiles(M, F_in, F_out, in_item, out_item, budget):
    """Choose (tm, tn, tk, f_out_pad, k_pad, k_tiled) under a VMEM budget."""
    # ---- TN / lane-dense F_out padding --------------------------------------
    f_out_128 = _round_up(F_out, 128)
    if f_out_128 <= 512:
        tn = f_out_128                 # single N block: weight fully resident
    else:
        tn = 128
        for cand in (512, 256, 128):   # prefer wide tiles (full MXU width,
            pad = _round_up(f_out_128, cand)   # fewer x re-reads); accept small pad
            if pad - f_out_128 <= cand // 2 or cand == 128:
                tn = cand
                break
    f_out_pad = _round_up(f_out_128, tn)

    def vmem_use(tm, tk, k_tiled):
        return (2 * tm * tk * in_item            # x tiles (double-buffered)
                + 2 * tk * tn * in_item          # weight tiles
                + 2 * tn * 4                     # f32 bias
                + 2 * tm * tn * out_item         # output tiles
                + (tm * tn * 4 if k_tiled else 0))   # f32 accumulator

    tm_cap = max(8, min(512, _round_up(M, 8)))
    tm_probe = min(tm_cap, 256)

    # ---- TK: keep the full reduction resident unless it would starve TM -----
    if F_in <= 256 or vmem_use(tm_probe, F_in, False) <= budget:
        tk, k_pad, k_tiled = F_in, F_in, False
    else:
        k_tiled = True
        tk = 128
        for cand in range(2048, 127, -128):          # largest K slab that fits
            if cand < F_in and vmem_use(tm_probe, cand, True) <= budget:
                tk = cand
                break
        for cand in range(tk, tk // 2, -128):        # prefer a divisor of F_in
            if F_in % cand == 0:                     # (avoids a K-padding pass)
                tk = cand
                break
        k_pad = _round_up(F_in, tk)

    # ---- TM: biggest tile that fits (pipeline efficiency, MXU M occupancy) --
    tm = 8
    for cand in (512, 256, 128, 64, 32, 16, 8):
        cand = min(cand, tm_cap)
        if vmem_use(cand, tk, k_tiled) <= budget:
            tm = cand
            break

    return tm, tn, tk, f_out_pad, k_pad, k_tiled


# ---------------------------------------------------------------------------
# Wrapper
# ---------------------------------------------------------------------------
def time_distributed_linear(x, weight, bias, *, compute_dtype=jnp.bfloat16,
                            block_k=None):
    """TimeDistributed(nn.Linear) forward.

    Args:
      x:      (B, T, ..., F_in)  ndim > 2; Linear acts on the last dim.
      weight: (F_in, F_out)      -- transposed relative to torch's (F_out, F_in).
      bias:   (F_out,)
      compute_dtype: dtype of the GEMM streams (default bf16: halves HBM
        traffic, native on all MXUs; accumulation is always f32).  Use
        jnp.float32 for exact f32 semantics.
      block_k: optional K-tile override (multiple of 128), mainly for tests.
    Returns:
      (B, T, ..., F_out) in x.dtype.
    """
    assert x.ndim > 2, "TimeDistributed expects input with ndim > 2"
    F_in, F_out = weight.shape
    assert x.shape[-1] == F_in, "last dim of x must match Linear in_features"

    lead_shape = x.shape[:-1]
    M = math.prod(lead_shape)
    out_dtype = x.dtype

    compute_dtype = jnp.dtype(compute_dtype)
    in_item = compute_dtype.itemsize
    out_item = jnp.dtype(out_dtype).itemsize

    budget, vmem_limit = _vmem_budget()
    tm, tn, tk, f_out_pad, k_pad, k_tiled = _pick_tiles(
        M, F_in, F_out, in_item, out_item, budget)

    if block_k is not None and block_k < F_in:
        assert block_k % 128 == 0, "block_k must be a multiple of 128"
        tk, k_tiled = block_k, True
        k_pad = _round_up(F_in, tk)

    # Glue (what .contiguous().view() + nn.Linear do): flatten leading dims.
    x2d = x.reshape(M, F_in)
    if x2d.dtype != compute_dtype:
        x2d = x2d.astype(compute_dtype)
    w = weight if weight.dtype == compute_dtype else weight.astype(compute_dtype)
    b2d = bias.astype(jnp.float32).reshape(1, F_out)   # pre-cast bias once

    # Only tiny operands / the reduction dim get padded; M is handled by a
    # ragged trailing grid block (no extra HBM pass over x or the output).
    if k_pad != F_in:            # rare: huge F_in not divisible by the K tile
        x2d = jnp.pad(x2d, ((0, 0), (0, k_pad - F_in)))
        w = jnp.pad(w, ((0, k_pad - F_in), (0, 0)))
    if f_out_pad != F_out:       # lane-dense output (unmasked vst)
        w = jnp.pad(w, ((0, 0), (0, f_out_pad - F_out)))
        b2d = jnp.pad(b2d, ((0, 0), (0, f_out_pad - F_out)))

    grid_m = pl.cdiv(M, tm)
    grid_n = f_out_pad // tn
    grid_k = k_pad // tk

    # Loop order: keep the operand whose redundant HBM re-reads would be
    # larger resident across the inner axis (only matters when both > 1).
    n_outer = True
    if grid_k == 1 and grid_n > 1 and grid_m > 1:
        x_reread = (grid_n - 1) * M * k_pad           # N-outer: x re-streamed
        w_reread = (grid_m - 1) * k_pad * f_out_pad   # M-outer: w re-streamed
        n_outer = x_reread <= w_reread

    if n_outer:
        grid = (grid_n, grid_m, grid_k)
        x_map = lambda n, m, k: (m, k)
        w_map = lambda n, m, k: (k, n)
        b_map = lambda n, m, k: (0, n)
        o_map = lambda n, m, k: (m, n)
    else:
        grid = (grid_m, grid_n, grid_k)
        x_map = lambda m, n, k: (m, k)
        w_map = lambda m, n, k: (k, n)
        b_map = lambda m, n, k: (0, n)
        o_map = lambda m, n, k: (m, n)

    kernel = _linear_kernel_kacc if grid_k > 1 else _linear_kernel
    scratch = [pltpu.VMEM((tm, tn), jnp.float32)] if grid_k > 1 else []

    cost = pl.CostEstimate(
        flops=2 * M * k_pad * f_out_pad,
        transcendentals=0,
        bytes_accessed=(M * k_pad * in_item + k_pad * f_out_pad * in_item
                        + f_out_pad * 4 + M * f_out_pad * out_item),
    )

    out2d = pl.pallas_call(
        kernel,
        out_shape=jax.ShapeDtypeStruct((M, f_out_pad), out_dtype),
        grid_spec=pltpu.PrefetchScalarGridSpec(
            num_scalar_prefetch=0,
            grid=grid,
            in_specs=[
                pl.BlockSpec((tm, tk), x_map),     # x tile (streams)
                pl.BlockSpec((tk, tn), w_map),     # weight tile
                pl.BlockSpec((1, tn), b_map),      # f32 bias
            ],
            out_specs=pl.BlockSpec((tm, tn), o_map),
            scratch_shapes=scratch,
        ),
        compiler_params=pltpu.CompilerParams(
            # M/N axes independent -> megacore sharding; K is a reduction.
            dimension_semantics=("parallel", "parallel", "arbitrary"),
            vmem_limit_bytes=vmem_limit,
        ),
        cost_estimate=cost,
    )(x2d, w, b2d)

    if f_out_pad != F_out:
        out2d = out2d[:, :F_out]
    return out2d.reshape(lead_shape + (F_out,))


if __name__ == "__main__":
    key = jax.random.PRNGKey(0)
    kx, kw, kb, kx4, kxr, kxk, kwk, kbk = jax.random.split(key, 8)

    # Small shapes consistent with TimeDistributed(nn.Linear(F_in, F_out)).
    B, T, F_in, F_out = 2, 8, 32, 64
    x = jax.random.normal(kx, (B, T, F_in), dtype=jnp.float32)
    weight = jax.random.normal(kw, (F_in, F_out), dtype=jnp.float32) * 0.1
    bias = jax.random.normal(kb, (F_out,), dtype=jnp.float32) * 0.1
    ref = (x.reshape(B * T, F_in) @ weight + bias).reshape(B, T, F_out)

    # Default path: bf16 GEMM streams, f32 accumulation.
    out = jax.block_until_ready(time_distributed_linear(x, weight, bias))
    assert out.shape == (B, T, F_out) and out.dtype == x.dtype
    assert jnp.allclose(out, ref, atol=5e-2, rtol=5e-2)

    # Exact-f32 path: tight check against the reference.
    out_f32 = jax.block_until_ready(
        time_distributed_linear(x, weight, bias, compute_dtype=jnp.float32))
    assert jnp.allclose(out_f32, ref, atol=1e-3, rtol=1e-3)

    # >3-D input (nn.Linear keeps the extra leading feature dims).
    C = 4
    x4 = jax.random.normal(kx4, (B, T, C, F_in), dtype=jnp.float32)
    out4 = jax.block_until_ready(
        time_distributed_linear(x4, weight, bias, compute_dtype=jnp.float32))
    ref4 = (x4.reshape(-1, F_in) @ weight + bias).reshape(B, T, C, F_out)
    assert out4.shape == (B, T, C, F_out)
    assert jnp.allclose(out4, ref4, atol=1e-3, rtol=1e-3)

    # Ragged M (B*T not a multiple of the M tile): trailing block masked.
    Tr = 5
    xr = jax.random.normal(kxr, (B, Tr, F_in), dtype=jnp.float32)
    outr = jax.block_until_ready(
        time_distributed_linear(xr, weight, bias, compute_dtype=jnp.float32))
    refr = (xr.reshape(B * Tr, F_in) @ weight + bias).reshape(B, Tr, F_out)
    assert outr.shape == (B, Tr, F_out)
    assert jnp.allclose(outr, refr, atol=1e-3, rtol=1e-3)

    # Force the K-tiled (f32 VMEM accumulator) path at small shapes.
    F_in_k, F_out_k = 256, 128
    xk = jax.random.normal(kxk, (B, T, F_in_k), dtype=jnp.float32)
    wk = jax.random.normal(kwk, (F_in_k, F_out_k), dtype=jnp.float32) * 0.05
    bk = jax.random.normal(kbk, (F_out_k,), dtype=jnp.float32) * 0.1
    outk = jax.block_until_ready(
        time_distributed_linear(xk, wk, bk, compute_dtype=jnp.float32,
                                block_k=128))
    refk = (xk.reshape(B * T, F_in_k) @ wk + bk).reshape(B, T, F_out_k)
    assert jnp.allclose(outk, refk, atol=1e-3, rtol=1e-3)

    print("KERNEL_OK")
</pallas_src>

<mosaic_0001>
module attributes {stable_mosaic.version = 11 : i64} {
  func.func @_linear_kernel(%arg0: i32, %arg1: i32, %arg2: i32, %arg3: memref<16x32xbf16, #tpu.memory_space<vmem>>, %arg4: memref<32x128xbf16, #tpu.memory_space<vmem>>, %arg5: memref<1x128xf32, #tpu.memory_space<vmem>>, %arg6: memref<16x128xf32, #tpu.memory_space<vmem>>) attributes {dimension_semantics = [#tpu.dimension_semantics<parallel>, #tpu.dimension_semantics<parallel>, #tpu.dimension_semantics<arbitrary>], iteration_bounds = array<i64: 1, 1, 1>, scalar_prefetch = 0 : i64, scratch_operands = 0 : i64, tpu.core_type = #tpu.core_type<tc>, window_params = [{transform_indices = @transform_0, window_bounds = array<i64: 16, 32>}, {transform_indices = @transform_1, window_bounds = array<i64: 32, 128>}, {transform_indices = @transform_2, window_bounds = array<i64: 1, 128>}, {transform_indices = @transform_3, window_bounds = array<i64: 16, 128>}]} {
    %c0 = arith.constant 0 : index
    %c0_0 = arith.constant 0 : index
    %0 = vector.load %arg3[%c0, %c0_0] : memref<16x32xbf16, #tpu.memory_space<vmem>>, vector<16x32xbf16>
    %c0_1 = arith.constant 0 : index
    %c0_2 = arith.constant 0 : index
    %1 = vector.load %arg4[%c0_1, %c0_2] : memref<32x128xbf16, #tpu.memory_space<vmem>>, vector<32x128xbf16>
    %cst = arith.constant dense<0.000000e+00> : vector<16x128xf32>
    %2 = tpu.matmul %0, %1, %cst {dimension_numbers = #tpu.dot_dimension_numbers<[1], [0], [0], [1], [0, 0, 1, 1], [], []>} : vector<16x32xbf16>, vector<32x128xbf16>, vector<16x128xf32> -> vector<16x128xf32>
    %c0_3 = arith.constant 0 : index
    %c0_4 = arith.constant 0 : index
    %3 = vector.load %arg5[%c0_3, %c0_4] : memref<1x128xf32, #tpu.memory_space<vmem>>, vector<1x128xf32>
    %4 = vector.broadcast %3 : vector<1x128xf32> to vector<16x128xf32>
    %5 = arith.addf %2, %4 : vector<16x128xf32>
    %c0_5 = arith.constant 0 : index
    %c0_6 = arith.constant 0 : index
    %6 = vector.load %arg6[%c0_5, %c0_6] : memref<16x128xf32, #tpu.memory_space<vmem>>, vector<16x128xf32>
    tpu.vector_store %arg6[%c0_5, %c0_6], %5 {strides = array<i32>} : memref<16x128xf32, #tpu.memory_space<vmem>>, vector<16x128xf32>,
    return
  }
  func.func @transform_0(%arg0: i32, %arg1: i32, %arg2: i32) -> (i32, i32) {
    %c0_i32 = arith.constant 0 : i32
    return %arg1, %arg2 : i32, i32
  }
  func.func @transform_1(%arg0: i32, %arg1: i32, %arg2: i32) -> (i32, i32) {
    %c0_i32 = arith.constant 0 : i32
    return %arg2, %arg0 : i32, i32
  }
  func.func @transform_2(%arg0: i32, %arg1: i32, %arg2: i32) -> (i32, i32) {
    %c0_i32 = arith.constant 0 : i32
    %c0_i32_0 = arith.constant 0 : i32
    return %c0_i32, %arg0 : i32, i32
  }
  func.func @transform_3(%arg0: i32, %arg1: i32, %arg2: i32) -> (i32, i32) {
    %c0_i32 = arith.constant 0 : i32
    return %arg1, %arg0 : i32, i32
  }
}

</mosaic_0001>

<llo_original>
// kernel: tpu_custom_call.1
$region0: #{tpu_custom_call.1}
  #allocation0 [shape = 'u32[]', space=smem, size = 0x4, offset = 0x4, fixed_abs, tag = 'smem constant byte address 0x4 - core index']
  #allocation1 [shape = 'u32[144,128]{1,0:T(1,128)}', space=vmem, size = 0x12000, scoped, tag = 'internal scratch']
  %s0 = inlined_call_operand.hbm [shape: bf16[16,32], index: 0, kind: input, shape index: {}]
  %s1 = inlined_call_operand.hbm [shape: bf16[32,128], index: 1, kind: input, shape index: {}]
  %s2 = inlined_call_operand.vmem [shape: f32[1,128], index: 2, kind: input, shape index: {}]
  %s3 = inlined_call_operand.hbm [shape: f32[16,128], index: 3, kind: output, shape index: {}]
  %s4 = sld [smem:[#allocation0]]
  $region30: #{tpu_custom_call.1} parent=0
    _
  %s6 = ssub.s32 1, %s4
  %s7 = scalar_select 0, %s6, %s4
  $region1: #{tpu_custom_call.1} parent=0
    #allocation2 [shape = 'u8[4096]{0}', space=vmem, size = 0x1000, scoped, tag = 'input window, operand 0, single buffered']
    #allocation3 [shape = 's32[1]{0}', space=sflag, size = 0x4, scoped, tag = 'scoped memory for tpu_custom_call.1']
    #allocation4 [shape = 's32[1]{0}', space=sflag, size = 0x4, scoped, tag = 'scoped memory for tpu_custom_call.1']
    #allocation5 [shape = 'u8[8192]{0}', space=vmem, size = 0x2000, scoped, tag = 'input window, operand 1, single buffered']
    #allocation6 [shape = 's32[1]{0}', space=sflag, size = 0x4, scoped, tag = 'scoped memory for tpu_custom_call.1']
    #allocation7 [shape = 'u8[8192]{0}', space=vmem, size = 0x2000, scoped, tag = 'output window, operand 0, single buffered']
    %8 = vsyncpa [#allocation3], 0
    %9 = vsyncpa [#allocation6], 0
    %10 = vsyncpa [#allocation4], 0
    // Predicated region
    $region2: #{tpu_custom_call.1} parent=1 // pred_check
      _
    $region3: #{tpu_custom_call.1} parent=1 // pred_check_branch
      %12 = sbr.rel (0) target = $region5
    $region4: #{tpu_custom_call.1} parent=1 // pred_region
      %s14 = ssub.s32 128, 128
      %15 = vsyncadd [#allocation3], %s14
      %s16 = sshll.u32 [#allocation2], 4
      %s17 = int_to_ptr.vmem [resolvable:$true] %s16
      %22 = dma.hbm_to_vmem [thread:$0]  %s0, 128, %s17, [#allocation3], 64, 64, 4
    $region5: #{tpu_custom_call.1} parent=1 // pred_fallthru
      _
    // Predicated region
    $region6: #{tpu_custom_call.1} parent=1 // pred_check
      _
    $region7: #{tpu_custom_call.1} parent=1 // pred_check_branch
      %24 = sbr.rel (0) target = $region9
    $region8: #{tpu_custom_call.1} parent=1 // pred_region
      %s26 = ssub.s32 256, 256
      %27 = vsyncadd [#allocation6], %s26
      %s28 = sshll.u32 [#allocation5], 4
      %s29 = int_to_ptr.vmem [resolvable:$true] %s28
      %34 = dma.hbm_to_vmem [thread:$0]  %s1, 256, %s29, [#allocation6], 64, 64, 4
    $region9: #{tpu_custom_call.1} parent=1 // pred_fallthru
      _
    // Predicated region
    $region10: #{tpu_custom_call.1} parent=1 // pred_check
      _
    $region11: #{tpu_custom_call.1} parent=1 // pred_check_branch
      %36 = sbr.rel (0) target = $region13
    $region12: #{tpu_custom_call.1} parent=1 // pred_region
      _
    $region13: #{tpu_custom_call.1} parent=1 // pred_fallthru
      _
    // Predicated region
    $region14: #{tpu_custom_call.1} parent=1 // pred_check
      _
    $region15: #{tpu_custom_call.1} parent=1 // pred_check_branch
      %38 = sbr.rel (0) target = $region17
    $region16: #{tpu_custom_call.1} parent=1 // pred_region
      %39 = dma.done [#allocation3], 128
    $region17: #{tpu_custom_call.1} parent=1 // pred_fallthru
      _
    // Predicated region
    $region18: #{tpu_custom_call.1} parent=1 // pred_check
      _
    $region19: #{tpu_custom_call.1} parent=1 // pred_check_branch
      %41 = sbr.rel (0) target = $region21
    $region20: #{tpu_custom_call.1} parent=1 // pred_region
      %42 = dma.done [#allocation6], 256
    $region21: #{tpu_custom_call.1} parent=1 // pred_fallthru
      _
    %v44 = vld [vmem:[#allocation2] sm:$0xf]
    %v45 = vld [vmem:[#allocation2 + $0x4] sm:$0xf]
    %v46 = vld [vmem:[#allocation5] sm:$0xf]
    %v47 = vld [vmem:[#allocation5 + $0x4] sm:$0xf]
    %v48 = vld [vmem:[#allocation5 + $0x8] sm:$0xf]
    %v49 = vld [vmem:[#allocation5 + $0xc] sm:$0xf]
    %v50 = vld [vmem:[%s2] sm:$0x1]
    %v52 = vlaneseq
    %v53 = vshrl.u32 %v52, 7
    %v54 = vsub.s32 0, %v53
    %v55 = vrot.slane %v50, %v54
    %v59 = vunpack.c.l.b16 %v44
    %v60 = vunpack.c.l.b16 %v45
    %v61 = vpack.c.b16 %v60, %v59
    %v66 = vunpack.c.l.b16 %v46
    %v67 = vunpack.c.l.b16 %v47
    %v68 = vunpack.c.l.b16 %v48
    %v69 = vunpack.c.l.b16 %v49
    %v70 = vpack.c.b16 %v67, %v66
    %v71 = vpack.c.b16 %v69, %v68
    %vm74 = vcmask 261120
    %v76 = vsel %vm74, %v61, 0
    %78 = vmatprep.subr.bf16.mxu0 0
    %79 = vmatpush1.bf16.msra.mxu0 %v70
    %80 = vmatprep.subr.bf16.mxu0 0
    %81 = vmatpush1.bf16.msra.mxu0 %v71
    %82 = vmatprep.subr.bf16.mxu0 0
    %83 = vmatpush1.bf16.msra.mxu0 0
    %84 = vmatprep.subr.bf16.mxu0 0
    %85 = vmatpush1.bf16.msra.mxu0 0
    %86 = vmatprep.subr.bf16.mxu0 0
    %87 = vmatpush1.bf16.msra.mxu0 0
    %88 = vmatprep.subr.bf16.mxu0 0
    %89 = vmatpush1.bf16.msra.mxu0 0
    %90 = vmatprep.subr.bf16.mxu0 0
    %91 = vmatpush1.bf16.msra.mxu0 0
    %92 = vmatprep.subr.bf16.mxu0 0
    %93 = vmatpush1.bf16.msra.mxu0 0
    %94 = vmatprep.subr.bf16.mxu0 0
    %95 = vmatpush1.bf16.msra.mxu0 0
    %96 = vmatprep.subr.bf16.mxu0 0
    %97 = vmatpush1.bf16.msra.mxu0 0
    %98 = vmatprep.subr.bf16.mxu0 0
    %99 = vmatpush1.bf16.msra.mxu0 0
    %100 = vmatprep.subr.bf16.mxu0 0
    %101 = vmatpush1.bf16.msra.mxu0 0
    %102 = vmatprep.subr.bf16.mxu0 0
    %103 = vmatpush1.bf16.msra.mxu0 0
    %104 = vmatprep.subr.bf16.mxu0 0
    %105 = vmatpush1.bf16.msra.mxu0 0
    %106 = vmatprep.subr.bf16.mxu0 0
    %107 = vmatpush1.bf16.msra.mxu0 0
    %108 = vmatprep.subr.bf16.mxu0 0
    %109 = vmatpush1.bf16.msra.mxu0 0
    %110 = vmatprep.mubr.bf16.mxu0 0
    %111 = vmatmul.mubr.bf16.gmra.mrb[0].mxu0 %v76
    %v112 = vpop.f32.mrb[0].mxu0
    %v113 = vadd.f32 %v55, %v112
    %v114 = vpop.f32.mrb[0].mxu0
    %v115 = vpop.f32.mrb[0].mxu0
    %v116 = vadd.f32 %v55, %v115
    %v117 = vpop.f32.mrb[0].mxu0
    %118 = vdwg.mxu0
    %119 = vst [vmem:[#allocation7] sm:$0xff] %v113
    %120 = vst [vmem:[#allocation7 + $0x8] sm:$0xff] %v116
    // Predicated region
    $region22: #{tpu_custom_call.1} parent=1 // pred_check
      _
    $region23: #{tpu_custom_call.1} parent=1 // pred_check_branch
      %122 = sbr.rel (0) target = $region25
    $region24: #{tpu_custom_call.1} parent=1 // pred_region
      %s124 = ssub.s32 256, 256
      %125 = vsyncadd [#allocation4], %s124
      %s126 = sshll.u32 [#allocation7], 4
      %s127 = int_to_ptr.vmem [resolvable:$true] %s126
      %132 = dma.vmem_to_hbm [thread:$0]  %s127, 256, %s3, [#allocation4], 128, 128, 8
    $region25: #{tpu_custom_call.1} parent=1 // pred_fallthru
      _
    // Predicated region
    $region26: #{tpu_custom_call.1} parent=1 // pred_check
      _
    $region27: #{tpu_custom_call.1} parent=1 // pred_check_branch
      %134 = sbr.rel (0) target = $region29
    $region28: #{tpu_custom_call.1} parent=1 // pred_region
      %135 = dma.done [#allocation4], 256
    $region29: #{tpu_custom_call.1} parent=1 // pred_fallthru
      _
    %136 = vsyncpa [#allocation3], 1
    %137 = vsyncpa [#allocation6], 1
    %138 = vsyncpa [#allocation4], 1

</llo_original>
